<compile_context>
chip_gen: v6e
topology: v6e:2x2x1
jax: 0.10.0
libtpu: 0.0.40
codegen_flags: <defaults>
</compile_context>

<pallas_src>
import jax
import jax.numpy as jnp
from jax import lax
from jax.experimental import pallas as pl
from jax.experimental.pallas import tpu as pltpu


def _conv3x3_lrelu_kernel(p_ref, w_ref, o_ref):
    # p_ref: (1, 9*Cin, H*W)  im2col patches for one batch element
    # w_ref: (Cout, 9*Cin)    conv weight, rows = output channels
    # o_ref: (1, Cout, H*W)   conv + LeakyReLU(0.2), channel-major, lane-dense
    acc = jnp.dot(w_ref[...], p_ref[0], preferred_element_type=jnp.float32)
    acc = jnp.maximum(acc, 0.2 * acc)              # LeakyReLU(0.2)
    o_ref[0] = acc.astype(o_ref.dtype)


def upscale_layer(x_nchw, weight_oihw):
    """Forward pass of UpscaleLayer.

    x_nchw:      (N, Cin, H, W)       float32
    weight_oihw: (4*Cin, Cin, 3, 3)   float32 (PyTorch conv weight layout)
    returns:     (N, Cin, 2H, 2W)     float32 (NCHW, matches PyTorch)
    """
    N, Cin, H, W = x_nchw.shape
    Cout = weight_oihw.shape[0]
    assert Cout == 4 * Cin
    r = 2
    HW = H * W
    K = 9 * Cin

    # ---- input side: im2col (one fused XLA producer; replaces the old
    #      standalone pad + layout transpose) --------------------------------
    xp = jnp.pad(x_nchw, ((0, 0), (0, 0), (1, 1), (1, 1)))
    taps = [xp[:, :, dy:dy + H, dx:dx + W]          # each (N, Cin, H, W)
            for dy in range(3) for dx in range(3)]
    patches = jnp.stack(taps, axis=2)               # (N, Cin, 9, H, W)
    patches = patches.reshape(N, K, HW)             # K ordered (cin, dy, dx)

    # PyTorch weight (Cout, Cin, 3, 3) flattens to the same (cin, dy, dx) order.
    wmat = weight_oihw.reshape(Cout, K)

    conv_cm = pl.pallas_call(
        _conv3x3_lrelu_kernel,
        out_shape=jax.ShapeDtypeStruct((N, Cout, HW), jnp.float32),
        grid_spec=pltpu.PrefetchScalarGridSpec(
            num_scalar_prefetch=0,
            grid=(N,),
            in_specs=[
                pl.BlockSpec((1, K, HW), lambda n: (n, 0, 0)),
                pl.BlockSpec((Cout, K), lambda n: (0, 0)),
            ],
            out_specs=pl.BlockSpec((1, Cout, HW), lambda n: (n, 0, 0)),
        ),
        compiler_params=pltpu.CompilerParams(
            dimension_semantics=("parallel",)),
    )(patches, wmat)

    # ---- output side: PixelShuffle(2), NCHW preserved (one fused XLA copy) --
    # conv_cm[n, c*4 + i*2 + j, y*W + x] -> out[n, c, 2y+i, 2x+j]
    y = conv_cm.reshape(N, Cin, r, r, H, W)          # (n, c, i, j, y, x)
    y = jnp.transpose(y, (0, 1, 4, 2, 5, 3))         # (n, c, y, i, x, j)
    return y.reshape(N, Cin, H * r, W * r)


def _reference(x_nchw, weight_oihw):
    # Pure-JAX reference (conv -> pixel shuffle -> leaky relu) for sanity check.
    out = lax.conv_general_dilated(
        x_nchw, weight_oihw, window_strides=(1, 1), padding=((1, 1), (1, 1)),
        dimension_numbers=("NCHW", "OIHW", "NCHW"))
    N, C4, H, W = out.shape
    C, r = C4 // 4, 2
    y = out.reshape(N, C, r, r, H, W)
    y = jnp.transpose(y, (0, 1, 4, 2, 5, 3)).reshape(N, C, H * r, W * r)
    return jnp.where(y >= 0, y, 0.2 * y)


if __name__ == "__main__":
    key = jax.random.PRNGKey(0)
    kx, kw = jax.random.split(key)

    N, Cin, H, W = 2, 4, 16, 16
    x = jax.random.normal(kx, (N, Cin, H, W), dtype=jnp.float32)
    # PyTorch conv weight layout (Cout, Cin, kH, kW), bias=False.
    w = jax.random.normal(kw, (4 * Cin, Cin, 3, 3), dtype=jnp.float32) * 0.1

    out = upscale_layer(x, w)
    out = jax.block_until_ready(out)

    ref = _reference(x, w)
    assert out.shape == (N, Cin, 2 * H, 2 * W)
    assert jnp.allclose(out, ref, atol=1e-4, rtol=1e-4)

    print("KERNEL_OK")
</pallas_src>

<mosaic_0001>
module attributes {stable_mosaic.version = 11 : i64} {
  func.func @_conv3x3_lrelu_kernel(%arg0: i32, %arg1: memref<1x36x256xf32, #tpu.memory_space<vmem>>, %arg2: memref<16x36xf32, #tpu.memory_space<vmem>>, %arg3: memref<1x16x256xf32, #tpu.memory_space<vmem>>) attributes {dimension_semantics = [#tpu.dimension_semantics<parallel>], iteration_bounds = array<i64: 2>, scalar_prefetch = 0 : i64, scratch_operands = 0 : i64, tpu.core_type = #tpu.core_type<tc>, window_params = [{transform_indices = @transform_0, window_bounds = array<i64: 1, 36, 256>}, {pipeline_mode = #tpu.pipeline_mode<synchronous>, transform_indices = @transform_1, window_bounds = array<i64: 16, 36>}, {transform_indices = @transform_2, window_bounds = array<i64: 1, 16, 256>}]} {
    %c0 = arith.constant 0 : index
    %c0_0 = arith.constant 0 : index
    %0 = vector.load %arg2[%c0, %c0_0] : memref<16x36xf32, #tpu.memory_space<vmem>>, vector<16x36xf32>
    %c0_1 = arith.constant 0 : index
    %c0_2 = arith.constant 0 : index
    %c0_3 = arith.constant 0 : index
    %1 = vector.load %arg1[%c0_1, %c0_2, %c0_3] : memref<1x36x256xf32, #tpu.memory_space<vmem>>, vector<1x36x256xf32>
    %2 = vector.shape_cast %1 : vector<1x36x256xf32> to vector<36x256xf32>
    %cst = arith.constant dense<0.000000e+00> : vector<16x256xf32>
    %3 = tpu.matmul %0, %2, %cst {dimension_numbers = #tpu.dot_dimension_numbers<[1], [0], [0], [1], [0, 0, 1, 1], [], []>} : vector<16x36xf32>, vector<36x256xf32>, vector<16x256xf32> -> vector<16x256xf32>
    %cst_4 = arith.constant 2.000000e-01 : f32
    %4 = vector.broadcast %cst_4 : f32 to vector<16x256xf32>
    %5 = arith.mulf %4, %3 : vector<16x256xf32>
    %6 = arith.maximumf %3, %5 : vector<16x256xf32>
    %c0_5 = arith.constant 0 : index
    %c0_6 = arith.constant 0 : index
    %c0_7 = arith.constant 0 : index
    %7 = vector.load %arg3[%c0_5, %c0_6, %c0_7] : memref<1x16x256xf32, #tpu.memory_space<vmem>>, vector<1x16x256xf32>
    %8 = vector.shape_cast %7 : vector<1x16x256xf32> to vector<16x256xf32>
    %9 = vector.shape_cast %6 : vector<16x256xf32> to vector<1x16x256xf32>
    tpu.vector_store %arg3[%c0_5, %c0_6, %c0_7], %9 {strides = array<i32>} : memref<1x16x256xf32, #tpu.memory_space<vmem>>, vector<1x16x256xf32>,
    return
  }
  func.func @transform_0(%arg0: i32) -> (i32, i32, i32) {
    %c0_i32 = arith.constant 0 : i32
    %c0_i32_0 = arith.constant 0 : i32
    %c0_i32_1 = arith.constant 0 : i32
    return %arg0, %c0_i32, %c0_i32_0 : i32, i32, i32
  }
  func.func @transform_1(%arg0: i32) -> (i32, i32) {
    %c0_i32 = arith.constant 0 : i32
    %c0_i32_0 = arith.constant 0 : i32
    %c0_i32_1 = arith.constant 0 : i32
    return %c0_i32, %c0_i32_0 : i32, i32
  }
  func.func @transform_2(%arg0: i32) -> (i32, i32, i32) {
    %c0_i32 = arith.constant 0 : i32
    %c0_i32_0 = arith.constant 0 : i32
    %c0_i32_1 = arith.constant 0 : i32
    return %arg0, %c0_i32, %c0_i32_0 : i32, i32, i32
  }
}

</mosaic_0001>

<llo_original>
// kernel: tpu_custom_call.1
$region0: #{tpu_custom_call.1}
  #allocation0 [shape = 'u32[]', space=smem, size = 0x4, offset = 0x4, fixed_abs, tag = 'smem constant byte address 0x4 - core index']
  #allocation1 [shape = 'u32[144,128]{1,0:T(1,128)}', space=vmem, size = 0x12000, scoped, tag = 'internal scratch']
  %s0 = inlined_call_operand.vmem [shape: f32[2,36,256], index: 0, kind: input, shape index: {}]
  %s1 = inlined_call_operand.vmem [shape: f32[16,36], index: 1, kind: input, shape index: {}]
  %s2 = inlined_call_operand.hbm [shape: f32[2,16,256], index: 2, kind: output, shape index: {}]
  %s3 = sld [smem:[#allocation0]]
  $region41: #{tpu_custom_call.1} parent=0
    _
  %s5 = ssub.s32 1, %s3
  %s6 = scalar_select 0, %s5, %s3
  $region1: #{tpu_custom_call.1} parent=0
    #allocation2 [shape = 'u8[32768]{0}', space=vmem, size = 0x8000, scoped, tag = 'output window, operand 0']
    #allocation3 [shape = 's32[2]{0}', space=sflag, size = 0x8, scoped, tag = 'scoped memory for tpu_custom_call.1']
    %7 = vsyncpa [#allocation3], 0
    %s8 = scalar_lea.sflag [#allocation3], 1
    %9 = vsyncpa %s8, 0
    loop: start=0, step=1, limit=4
    $region2: #{tpu_custom_call.1} parent=1 // loop_pre_header
      _
    $region3: #{tpu_custom_call.1} parent=1 // loop_header
      %s11 = sphi 0, %s15
      %p12 = scmp.ge.s32.totalorder %s11, 4
      %s21 = sphi 0, %s23
      %s24 = sphi 0, %s21
      %s25 = sphi 0, %s24
      %s41 = sphi 0, %s25
      %s45 = sphi 0, %s45
      %s47 = sphi 0, %s45
      %s48 = sphi 0, %s47
      %s62 = sphi 0, %s48
      %s68 = sphi 0, %s70
      %s71 = sphi 0, %s68
      %s72 = sphi 0, %s71
      %s88 = sphi 0, %s72
    $region4: #{tpu_custom_call.1} parent=1 // loop_header_branch
      %14 = sbr.rel (%p12) target = $region8
    $region5: #{tpu_custom_call.1} parent=1 // loop_body
      %s16 = ssub.s32 %s11, 1
      %s17 = ssub.s32 %s11, 2
      %s18 = sadd.s32 %s11, 1
      %s19 = ssub.s32 %s11, %s18
      %p20 = scmp.eq.s32.totalorder %s19, 0
      %s22 = sadd.s32 %s21, 1
      %s23 = scalar_select %p20, %s21, %s22
      %p26 = pneg %p20
      %p27 = scmp.eq.s32.totalorder %s11, 1
      %p28 = por %p26, %p27
      %p29 = scmp.ne.s32.totalorder %s21, %s24
      %p30 = scmp.eq.s32.totalorder %s11, 0
      %p31 = por %p29, %p30
      %p32 = scmp.ne.s32.totalorder %s21, %s24
      %p33 = scmp.eq.s32.totalorder %s16, 1
      %p34 = por %p32, %p33
      %p35 = scmp.ne.s32.totalorder %s24, %s25
      %p36 = scmp.eq.s32.totalorder %s16, 0
      %p37 = por %p35, %p36
      %p38 = scmp.ne.s32.totalorder %s24, %s25
      %p39 = scmp.eq.s32.totalorder %s17, 1
      %p40 = por %p38, %p39
      %p42 = scmp.ne.s32.totalorder %s25, %s41
      %p43 = scmp.eq.s32.totalorder %s17, 0
      %p44 = por %p42, %p43
      %s46 = sadd.s32 %s45, 1
      %p49 = scmp.eq.s32.totalorder %s11, 1
      %p50 = scmp.ne.s32.totalorder %s45, %s47
      %p51 = scmp.eq.s32.totalorder %s11, 0
      %p52 = por %p50, %p51
      %p53 = scmp.ne.s32.totalorder %s45, %s47
      %p54 = scmp.eq.s32.totalorder %s16, 1
      %p55 = por %p53, %p54
      %p56 = scmp.ne.s32.totalorder %s47, %s48
      %p57 = scmp.eq.s32.totalorder %s16, 0
      %p58 = por %p56, %p57
      %p59 = scmp.ne.s32.totalorder %s47, %s48
      %p60 = scmp.eq.s32.totalorder %s17, 1
      %p61 = por %p59, %p60
      %p63 = scmp.ne.s32.totalorder %s48, %s62
      %p64 = scmp.eq.s32.totalorder %s17, 0
      %p65 = por %p63, %p64
      %s66 = ssub.s32 %s11, %s18
      %p67 = scmp.eq.s32.totalorder %s66, 0
      %s69 = sadd.s32 %s68, 1
      %s70 = scalar_select %p67, %s68, %s69
      %p73 = pneg %p67
      %p74 = scmp.eq.s32.totalorder %s11, 1
      %p75 = por %p73, %p74
      %p76 = scmp.ne.s32.totalorder %s68, %s71
      %p77 = scmp.eq.s32.totalorder %s11, 0
      %p78 = por %p76, %p77
      %p79 = scmp.ne.s32.totalorder %s68, %s71
      %p80 = scmp.eq.s32.totalorder %s16, 1
      %p81 = por %p79, %p80
      %p82 = scmp.ne.s32.totalorder %s71, %s72
      %p83 = scmp.eq.s32.totalorder %s16, 0
      %p84 = por %p82, %p83
      %p85 = scmp.ne.s32.totalorder %s71, %s72
      %p86 = scmp.eq.s32.totalorder %s17, 1
      %p87 = por %p85, %p86
      %p89 = scmp.ne.s32.totalorder %s72, %s88
      %p90 = scmp.eq.s32.totalorder %s17, 0
      %p91 = por %p89, %p90
      %p92 = scmp.le.s32.totalorder 1, %s11
      %p93 = scmp.lt.s32.totalorder %s11, 3
      %p94 = pnand %p92, %p93
      %p95 = pneg %p94
      // Predicated region
      $region9: #{tpu_custom_call.1} parent=5 // pred_check
        _
      $region10: #{tpu_custom_call.1} parent=5 // pred_check_branch
        %97 = sbr.rel (%p94) target = $region12
      $region11: #{tpu_custom_call.1} parent=5 // pred_region
        %s98 = ssub.s32 %s11, 1
        // Predicated region
        $region13: #{tpu_custom_call.1} parent=11 // pred_check
          %p99 = pneg %p58
        $region14: #{tpu_custom_call.1} parent=11 // pred_check_branch
          %101 = sbr.rel (%p99) target = $region16
        $region15: #{tpu_custom_call.1} parent=11 // pred_region
          _
        $region16: #{tpu_custom_call.1} parent=11 // pred_fallthru
          _
      $region12: #{tpu_custom_call.1} parent=5 // pred_fallthru
        _
      %p102 = scmp.lt.s32.totalorder %s11, 2
      // Predicated region
      $region17: #{tpu_custom_call.1} parent=5 // pred_check
        %p103 = pneg %p102
      $region18: #{tpu_custom_call.1} parent=5 // pred_check_branch
        %105 = sbr.rel (%p103) target = $region20
      $region19: #{tpu_custom_call.1} parent=5 // pred_region
        // Predicated region
        $region21: #{tpu_custom_call.1} parent=19 // pred_check
          %p106 = pneg %p31
        $region22: #{tpu_custom_call.1} parent=19 // pred_check_branch
          %108 = sbr.rel (%p106) target = $region24
        $region23: #{tpu_custom_call.1} parent=19 // pred_region
          %p109 = scmp.lt.s32.totalorder %s11, 1
          %s110 = scalar_select %p109, %s11, 1
          %s111 = smul.addr %s110, 10
          %s112 = smul.addr %s111, 8
          %s113 = scalar_lea.vmem %s0, %s112
        $region24: #{tpu_custom_call.1} parent=19 // pred_fallthru
          _
      $region20: #{tpu_custom_call.1} parent=5 // pred_fallthru
        _
      %p114 = scmp.le.s32.totalorder 1, %s11
      %p115 = scmp.lt.s32.totalorder %s11, 3
      %p116 = pnand %p114, %p115
      %p117 = pneg %p116
      // Predicated region
      $region25: #{tpu_custom_call.1} parent=5 // pred_check
        _
      $region26: #{tpu_custom_call.1} parent=5 // pred_check_branch
        %119 = sbr.rel (%p116) target = $region28
      $region27: #{tpu_custom_call.1} parent=5 // pred_region
        %s120 = ssub.s32 %s11, 1
        %p121 = scmp.lt.s32.totalorder %s16, 1
        %s122 = scalar_select %p121, %s16, 1
        %s123 = smul.addr %s122, 10
        %s124 = smul.addr %s123, 8
        %s125 = scalar_lea.vmem %s0, %s124
        %p126 = pneg %p37
        %p127 = pneg %p34
        %p128 = pneg %p58
        %p129 = pneg %p55
        %p130 = pneg %p84
        %p131 = pneg %p81
        %s132 = sand.u32 %s71, 1
        %s133 = scalar_lea.sflag [#allocation3], %s132
        %s134 = sand.u32 %s71, 1
        %s135 = smul.addr %s134, 32
        %s136 = scalar_lea.vmem [#allocation2], %s135
        %p137 = scmp.lt.s32.totalorder %s16, 1
        %s138 = scalar_select %p137, %s16, 1
        %s139 = smul.addr %s138, 10
        %s140 = smul.addr %s139, 8
        %s141 = scalar_lea.vmem %s0, %s140
        %v142 = vld [vmem:[%s1] sm:$0xff]
        %v143 = vld [vmem:[%s1 + $0x8] sm:$0xff]
        %v144 = vld [vmem:[%s141] sm:$0xff]
        %v145 = vld [vmem:[%s141 + $0x8] sm:$0xff]
        %v146 = vld [vmem:[%s141 + $0x10] sm:$0xff]
        %v147 = vld [vmem:[%s141 + $0x18] sm:$0xff]
        %v148 = vld [vmem:[%s141 + $0x20] sm:$0xff]
        %v149 = vld [vmem:[%s141 + $0x28] sm:$0xff]
        %v150 = vld [vmem:[%s141 + $0x30] sm:$0xff]
        %v151 = vld [vmem:[%s141 + $0x38] sm:$0xff]
        %v152 = vld [vmem:[%s141 + $0x40] sm:$0xf]
        %v153 = vld [vmem:[%s141 + $0x48] sm:$0xf]
        %vm154 = vcmask 293888
        %v156 = vsel %vm154, %v142, 0
        %v159 = vsel %vm154, %v143, 0
        %vm161 = vcmask 1043456
        %v163 = vsel %vm161, %v152, 0
        %v166 = vsel %vm161, %v153, 0
        %168 = vmatprep.subr.mxu0 0.0
        %169 = vmatpush1.msra.mxu0 0.0
        %170 = vmatprep.subr.mxu0 0.0
        %171 = vmatpush1.msra.mxu0 0.0
        %172 = vmatprep.subr.mxu0 0.0
        %173 = vmatpush1.msra.mxu0 0.0
        %174 = vmatprep.subr.mxu0 0.0
        %175 = vmatpush1.msra.mxu0 0.0
        %176 = vmatprep.subr.mxu0 0.0
        %177 = vmatpush1.msra.mxu0 0.0
        %178 = vmatprep.subr.mxu0 0.0
        %179 = vmatpush1.msra.mxu0 0.0
        %180 = vmatprep.subr.mxu0 0.0
        %181 = vmatpush1.msra.mxu0 0.0
        %182 = vmatprep.subr.mxu0 0.0
        %183 = vmatpush1.msra.mxu0 0.0
        %184 = vmatprep.subr.mxu0 0.0
        %185 = vmatpush1.msra.mxu0 0.0
        %186 = vmatprep.subr.mxu0 0.0
        %187 = vmatpush1.msra.mxu0 0.0
        %188 = vmatprep.subr.mxu0 0.0
        %189 = vmatpush1.msra.mxu0 0.0
        %190 = vmatprep.subr.mxu0 %v166
        %191 = vmatpush1.msra.mxu0 %v163
        %192 = vmatprep.subr.mxu0 %v151
        %193 = vmatpush1.msra.mxu0 %v150
        %194 = vmatprep.subr.mxu0 %v149
        %195 = vmatpush1.msra.mxu0 %v148
        %196 = vmatprep.subr.mxu0 %v147
        %197 = vmatpush1.msra.mxu0 %v146
        %198 = vmatprep.subr.mxu0 %v145
        %199 = vmatpush1.msra.mxu0 %v144
        %200 = vmatprep.subr.mxu0 0.0
        %201 = vmatpush2.msra.mxu0 0.0
        %202 = vmatprep.subr.mxu0 0.0
        %203 = vmatpush2.msra.mxu0 0.0
        %204 = vmatprep.subr.mxu0 0.0
        %205 = vmatpush2.msra.mxu0 0.0
        %206 = vmatprep.subr.mxu0 0.0
        %207 = vmatpush2.msra.mxu0 0.0
        %208 = vmatprep.subr.mxu0 0.0
        %209 = vmatpush2.msra.mxu0 0.0
        %210 = vmatprep.subr.mxu0 0.0
        %211 = vmatpush2.msra.mxu0 0.0
        %212 = vmatprep.subr.mxu0 0.0
        %213 = vmatpush2.msra.mxu0 0.0
        %214 = vmatprep.subr.mxu0 0.0
        %215 = vmatpush2.msra.mxu0 0.0
        %216 = vmatprep.subr.mxu0 0.0
        %217 = vmatpush2.msra.mxu0 0.0
        %218 = vmatprep.subr.mxu0 0.0
        %219 = vmatpush2.msra.mxu0 0.0
        %220 = vmatprep.subr.mxu0 0.0
        %221 = vmatpush2.msra.mxu0 0.0
        %222 = vmatprep.subr.mxu0 0.0
        %223 = vmatpush2.msra.mxu0 0.0
        %224 = vmatprep.subr.mxu0 0.0
        %225 = vmatpush2.msra.mxu0 0.0
        %226 = vmatprep.subr.mxu0 0.0
        %227 = vmatpush2.msra.mxu0 0.0
        %228 = vmatprep.subr.mxu0 0.0
        %229 = vmatpush2.msra.mxu0 0.0
        %230 = vmatprep.subr.mxu0 0.0
        %231 = vmatpush2.msra.mxu0 0.0
        %232 = vmatprep.mubr.f32.mxu0 0.0
        %233 = vmatmul.mubr.f32.gmra.mxu0 %v156
        %v234 = vpop.f32.mrf.mxu0
        %v235 = vadd.f32 0.0, %v234
        %v236 = vpop.f32.mrf.mxu0
        %v237 = vadd.f32 0.0, %v236
        %238 = vmatprep.mubr.f32.mxu0 0.0
        %239 = vmatmul.mubr.f32.gmra.mxu0 %v159
        %v240 = vpop.f32.mrf.mxu0
        %v241 = vadd.f32 0.0, %v240
        %v242 = vpop.f32.mrf.mxu0
        %v243 = vadd.f32 0.0, %v242
        %244 = vdwg.mxu0
        %v245 = vmul.f32 %v235, 0.2
        %v246 = vmul.f32 %v237, 0.2
        %v247 = vmul.f32 %v241, 0.2
        %v248 = vmul.f32 %v243, 0.2
        %v249 = vmax.f32 %v235, %v245
        %v250 = vmax.f32 %v237, %v246
        %v251 = vmax.f32 %v241, %v247
        %v252 = vmax.f32 %v243, %v248
        %253 = vst [vmem:[%s136] sm:$0xff] %v249
        %254 = vst [vmem:[%s136 + $0x8] sm:$0xff] %v250
        %255 = vst [vmem:[%s136 + $0x10] sm:$0xff] %v251
        %256 = vst [vmem:[%s136 + $0x18] sm:$0xff] %v252
        %s257 = sand.u32 %s71, 1
        %s258 = scalar_lea.sflag [#allocation3], %s257
        %s259 = sand.u32 %s71, 1
        %s260 = smul.addr %s259, 32
        %s261 = scalar_lea.vmem [#allocation2], %s260
        // Predicated region
        $region29: #{tpu_custom_call.1} parent=27 // pred_check
          %p262 = pneg %p81
        $region30: #{tpu_custom_call.1} parent=27 // pred_check_branch
          %264 = sbr.rel (%p262) target = $region32
        $region31: #{tpu_custom_call.1} parent=27 // pred_region
          %s266 = ssub.s32 512, 512
          %267 = vsyncadd %s258, %s266
          %s268 = smul.addr %s16, 4
          %s269 = smul.addr %s268, 128
          %s270 = scalar_lea.hbm %s2, %s269
          %s271 = sshll.u32 %s261, 4
          %s272 = int_to_ptr.vmem [resolvable:$true] %s271
          %277 = dma.vmem_to_hbm [thread:$0]  %s272, 512, %s270, %s258, 256, 256, 16
        $region32: #{tpu_custom_call.1} parent=27 // pred_fallthru
          _
      $region28: #{tpu_custom_call.1} parent=5 // pred_fallthru
        _
      %p278 = scmp.le.s32.totalorder 2, %s11
      // Predicated region
      $region33: #{tpu_custom_call.1} parent=5 // pred_check
        %p279 = pneg %p278
      $region34: #{tpu_custom_call.1} parent=5 // pred_check_branch
        %281 = sbr.rel (%p279) target = $region36
      $region35: #{tpu_custom_call.1} parent=5 // pred_region
        %s282 = ssub.s32 %s11, 2
        // Predicated region
        $region37: #{tpu_custom_call.1} parent=35 // pred_check
          %p283 = pneg %p87
        $region38: #{tpu_custom_call.1} parent=35 // pred_check_branch
          %285 = sbr.rel (%p283) target = $region40
        $region39: #{tpu_custom_call.1} parent=35 // pred_region
          %s286 = sand.u32 %s72, 1
          %s287 = scalar_lea.sflag [#allocation3], %s286
          %s288 = sand.u32 %s72, 1
          %s289 = smul.addr %s288, 32
          %s290 = scalar_lea.vmem [#allocation2], %s289
          %291 = dma.done %s287, 512
        $region40: #{tpu_custom_call.1} parent=35 // pred_fallthru
          _
      $region36: #{tpu_custom_call.1} parent=5 // pred_fallthru
        _
    $region6: #{tpu_custom_call.1} parent=1 // loop_footer
      %s15 = sadd.s32 1, %s11
    $region7: #{tpu_custom_call.1} parent=1 // loop_footer_branch
      %10 = sbr.rel target = $region3
    $region8: #{tpu_custom_call.1} parent=1 // loop_exit
      _
    %292 = vsyncpa [#allocation3], 1
    %s293 = scalar_lea.sflag [#allocation3], 1
    %294 = vsyncpa %s293, 1

</llo_original>
